<compile_context>
chip_gen: v7x
topology: tpu7x:2x2x1
jax: 0.10.0
libtpu: 0.0.40
codegen_flags: <defaults>
</compile_context>

<pallas_src>
import jax
import jax.numpy as jnp
from jax.experimental import pallas as pl
from jax.experimental.pallas import tpu as pltpu


def _round_up(v, m):
    return ((v + m - 1) // m) * m


def _attention_kernel(x_ref, w1_ref, b1_ref, w2_ref, b2_ref, w3_ref,
                      e_ref, sum_ref, o_ref):
    """One batch tile.

    x_ref   : (Bb, T*D)    lane-dense input slab (f32 or bf16)
    w1_ref  : (T*D, T*H)   block-diagonal Linear1 weight
    b1_ref  : (1,  T*H)    tiled Linear1 bias
    w2_ref  : (T*H, T*H2)  block-diagonal Linear2 weight
    b2_ref  : (1,  T*H2)   tiled Linear2 bias
    w3_ref  : (T*H2, T)    block-diagonal Linear3 weight (one logit / timestep)
    e_ref   : (T, T*D)     0/1 expansion matrix  attn (Bb,T) -> (Bb, T*D)
    sum_ref : (T*D, D)     0/1 segment-sum matrix (Bb, T*D) -> (Bb, D)
    o_ref   : (Bb, D)
    """
    xw = x_ref[...]   # stay in streamed dtype; promoted per-use (short liveness)

    # ---- scoring MLP, lane-dense activations (Bb, T*H) / (Bb, T*H2) ----
    h1 = jnp.tanh(jnp.dot(xw, w1_ref[...], preferred_element_type=jnp.float32)
                  + b1_ref[...])
    h2 = jnp.tanh(jnp.dot(h1, w2_ref[...], preferred_element_type=jnp.float32)
                  + b2_ref[...])

    # One logit per (b, t).  The final bias b3 is constant over T and softmax
    # over T is shift-invariant, so it is folded out exactly.
    logits = jnp.dot(h2, w3_ref[...], preferred_element_type=jnp.float32)  # (Bb, T)

    # ---- softmax over the sequence axis (torch dim=1) ----
    m = jnp.max(logits, axis=-1, keepdims=True)
    p = jnp.exp(logits - m)
    attn = p * pl.reciprocal(jnp.sum(p, axis=-1, keepdims=True), approx=False)

    # ---- attention pooling on the flat slab, all on the MXU ----
    # out[b, d] = sum_t attn[b, t] * x[b, t*D + d]
    attn_rep = jnp.dot(attn, e_ref[...], preferred_element_type=jnp.float32)  # (Bb, T*D)
    weighted = attn_rep * xw                                                  # f32
    o_ref[...] = jnp.dot(weighted, sum_ref[...],
                         preferred_element_type=jnp.float32).astype(o_ref.dtype)


def attention_forward(x, w1, b1, w2, b2, w3, b3, *, block_b=1024,
                      out_dtype=jnp.float32):
    """x: (B, T, D); weights stored as (in, out) i.e. torch `weight.T`.

    Returns (B, D).  `b3` is accepted for API parity but has no effect on the
    forward output (softmax over T is invariant to a constant logit shift).
    x may be f32 or bf16; all accumulation is f32 in-kernel.
    """
    del b3  # exactly folded out (constant shift of the softmax logits)
    B, T, D = x.shape
    H = w1.shape[1]
    H2 = w2.shape[1]
    TD, TH, TH2 = T * D, T * H, T * H2

    # Lane-dense 2D slab (free, contiguous reshape in the wrapper).
    x2 = x.reshape(B, TD)

    # Batch tile: sublane multiple of 8; keep >= 2 grid steps when the batch
    # allows (v7x has 2 TensorCores sharding "parallel" axes); cap at block_b.
    Bb = max(8, min(block_b, _round_up(B, 8)))
    if B >= 16 and _round_up(B, 8) <= Bb:
        Bb = max(8, _round_up(pl.cdiv(B, 2), 8))
    n_blocks = pl.cdiv(B, Bb)
    B_pad = n_blocks * Bb
    if B_pad != B:
        x2 = jnp.pad(x2, ((0, B_pad - B), (0, 0)))

    # Block-diagonal-over-T weights -> lane-dense MLP activations in-kernel.
    eye_t = jnp.eye(T, dtype=w1.dtype)
    w1_blk = jnp.kron(eye_t, w1)                              # (T*D, T*H)
    w2_blk = jnp.kron(eye_t, w2)                              # (T*H, T*H2)
    w3_blk = jnp.kron(eye_t, w3.reshape(H2, 1))               # (T*H2, T)
    b1_t = jnp.tile(b1.reshape(1, H), (1, T))                 # (1, T*H)
    b2_t = jnp.tile(b2.reshape(1, H2), (1, T))                # (1, T*H2)

    # 0/1 matrices for MXU-based broadcast / segment-sum (f32: exact).
    expand = jnp.kron(jnp.eye(T, dtype=jnp.float32),
                      jnp.ones((1, D), jnp.float32))          # (T, T*D)
    segsum = jnp.tile(jnp.eye(D, dtype=jnp.float32), (T, 1))  # (T*D, D)

    x_tile_bytes = Bb * TD * x2.dtype.itemsize
    vmem_limit = int(min(64 << 20, max(32 << 20, 6 * x_tile_bytes)))

    cost = pl.CostEstimate(
        flops=2 * B_pad * (TD * TH + TH * TH2 + TH2 * T + T * TD + TD * D),
        transcendentals=B_pad * (TH + TH2 + T),
        bytes_accessed=(x2.dtype.itemsize * B_pad * TD
                        + 4 * B_pad * D
                        + w1_blk.dtype.itemsize * (TD * TH + TH * TH2 + TH2 * T)
                        + 4 * (T * TD + TD * D + TH + TH2)),
    )

    out = pl.pallas_call(
        _attention_kernel,
        out_shape=jax.ShapeDtypeStruct((B_pad, D), out_dtype),
        grid_spec=pltpu.PrefetchScalarGridSpec(
            num_scalar_prefetch=0,
            grid=(n_blocks,),
            in_specs=[
                pl.BlockSpec((Bb, TD),  lambda i: (i, 0)),   # x slab (streamed)
                pl.BlockSpec((TD, TH),  lambda i: (0, 0)),   # w1 block-diag
                pl.BlockSpec((1, TH),   lambda i: (0, 0)),   # b1 tiled
                pl.BlockSpec((TH, TH2), lambda i: (0, 0)),   # w2 block-diag
                pl.BlockSpec((1, TH2),  lambda i: (0, 0)),   # b2 tiled
                pl.BlockSpec((TH2, T),  lambda i: (0, 0)),   # w3 block-diag
                pl.BlockSpec((T, TD),   lambda i: (0, 0)),   # expansion matrix
                pl.BlockSpec((TD, D),   lambda i: (0, 0)),   # segment-sum matrix
            ],
            out_specs=pl.BlockSpec((Bb, D), lambda i: (i, 0)),
        ),
        compiler_params=pltpu.CompilerParams(
            dimension_semantics=("parallel",),
            vmem_limit_bytes=vmem_limit),
        cost_estimate=cost,
    )(x2, w1_blk, b1_t, w2_blk, b2_t, w3_blk, expand, segsum)

    return out[:B]


def attention_reference(x, w1, b1, w2, b2, w3, b3):
    """Pure-JAX reference matching the PyTorch forward."""
    h = jnp.tanh(jnp.einsum("btd,dh->bth", x, w1) + b1)
    h = jnp.tanh(jnp.einsum("bth,hk->btk", h, w2) + b2)
    s = jnp.einsum("btk,ko->bto", h, w3) + b3            # (B, T, 1)
    a = jax.nn.softmax(s, axis=1)                        # softmax over dim=1
    out = jnp.einsum("bto,btd->bod", a, x)               # bmm(attn^T, x)
    return out[:, 0, :]                                  # squeeze dim=1


if __name__ == "__main__":
    # Small shapes consistent with the module's forward.
    B, T, D = 20, 8, 32         # in_dim = 32
    H = 16                      # hid_dim = 16 -> hid_dim // 2 = 8
    H2 = H // 2

    key = jax.random.PRNGKey(0)
    kx, k1, k2, k3, k4, k5, k6 = jax.random.split(key, 7)

    x = jax.random.normal(kx, (B, T, D), dtype=jnp.float32)

    # Deterministic parameter init (weights stored as (in, out): y = x @ w + b).
    w1 = jax.random.normal(k1, (D, H),  dtype=jnp.float32) * 0.1
    b1 = jax.random.normal(k2, (H,),    dtype=jnp.float32) * 0.1
    w2 = jax.random.normal(k3, (H, H2), dtype=jnp.float32) * 0.1
    b2 = jax.random.normal(k4, (H2,),   dtype=jnp.float32) * 0.1
    w3 = jax.random.normal(k5, (H2, 1), dtype=jnp.float32) * 0.1
    b3 = jax.random.normal(k6, (1,),    dtype=jnp.float32) * 0.1

    ref = attention_reference(x, w1, b1, w2, b2, w3, b3)

    # Default tiling: batch split into 2 grid steps (megacore-friendly),
    # padded to a multiple of 8.
    out = jax.block_until_ready(attention_forward(x, w1, b1, w2, b2, w3, b3))
    assert out.shape == (B, D)
    assert jnp.allclose(out, ref, atol=5e-5, rtol=5e-5), (
        f"f32 max abs err = {jnp.max(jnp.abs(out - ref))}")

    # Forced tiny tile: exercises padding + multi-step batch-tiled grid.
    out2 = jax.block_until_ready(
        attention_forward(x, w1, b1, w2, b2, w3, b3, block_b=8))
    assert out2.shape == (B, D)
    assert jnp.allclose(out2, ref, atol=5e-5, rtol=5e-5), (
        f"f32 (block_b=8) max abs err = {jnp.max(jnp.abs(out2 - ref))}")

    # bf16 streaming path: kernel promotes to f32 at each use; compare against
    # the f32 reference evaluated on the bf16-rounded input.
    x_bf16 = x.astype(jnp.bfloat16)
    ref_bf16 = attention_reference(x_bf16.astype(jnp.float32),
                                   w1, b1, w2, b2, w3, b3)
    out3 = jax.block_until_ready(
        attention_forward(x_bf16, w1, b1, w2, b2, w3, b3))
    assert out3.shape == (B, D)
    assert jnp.allclose(out3, ref_bf16, atol=1e-3, rtol=1e-3), (
        f"bf16 max abs err = {jnp.max(jnp.abs(out3 - ref_bf16))}")

    print("KERNEL_OK")
</pallas_src>

<mosaic_0001>
module attributes {stable_mosaic.version = 11 : i64} {
  func.func @_attention_kernel(%arg0: i32, %arg1: memref<16x256xf32, #tpu.memory_space<vmem>>, %arg2: memref<256x128xf32, #tpu.memory_space<vmem>>, %arg3: memref<1x128xf32, #tpu.memory_space<vmem>>, %arg4: memref<128x64xf32, #tpu.memory_space<vmem>>, %arg5: memref<1x64xf32, #tpu.memory_space<vmem>>, %arg6: memref<64x8xf32, #tpu.memory_space<vmem>>, %arg7: memref<8x256xf32, #tpu.memory_space<vmem>>, %arg8: memref<256x32xf32, #tpu.memory_space<vmem>>, %arg9: memref<16x32xf32, #tpu.memory_space<vmem>>) attributes {dimension_semantics = [#tpu.dimension_semantics<parallel>], iteration_bounds = array<i64: 2>, scalar_prefetch = 0 : i64, scratch_operands = 0 : i64, tpu.core_type = #tpu.core_type<tc>, window_params = [{transform_indices = @transform_0, window_bounds = array<i64: 16, 256>}, {pipeline_mode = #tpu.pipeline_mode<synchronous>, transform_indices = @transform_1, window_bounds = array<i64: 256, 128>}, {pipeline_mode = #tpu.pipeline_mode<synchronous>, transform_indices = @transform_2, window_bounds = array<i64: 1, 128>}, {pipeline_mode = #tpu.pipeline_mode<synchronous>, transform_indices = @transform_3, window_bounds = array<i64: 128, 64>}, {pipeline_mode = #tpu.pipeline_mode<synchronous>, transform_indices = @transform_4, window_bounds = array<i64: 1, 64>}, {pipeline_mode = #tpu.pipeline_mode<synchronous>, transform_indices = @transform_5, window_bounds = array<i64: 64, 8>}, {pipeline_mode = #tpu.pipeline_mode<synchronous>, transform_indices = @transform_6, window_bounds = array<i64: 8, 256>}, {pipeline_mode = #tpu.pipeline_mode<synchronous>, transform_indices = @transform_7, window_bounds = array<i64: 256, 32>}, {transform_indices = @transform_8, window_bounds = array<i64: 16, 32>}]} {
    %c0 = arith.constant 0 : index
    %c0_0 = arith.constant 0 : index
    %0 = vector.load %arg1[%c0, %c0_0] : memref<16x256xf32, #tpu.memory_space<vmem>>, vector<16x256xf32>
    %c0_1 = arith.constant 0 : index
    %c0_2 = arith.constant 0 : index
    %1 = vector.load %arg2[%c0_1, %c0_2] : memref<256x128xf32, #tpu.memory_space<vmem>>, vector<256x128xf32>
    %cst = arith.constant dense<0.000000e+00> : vector<16x128xf32>
    %2 = tpu.matmul %0, %1, %cst {dimension_numbers = #tpu.dot_dimension_numbers<[1], [0], [0], [1], [0, 0, 1, 1], [], []>} : vector<16x256xf32>, vector<256x128xf32>, vector<16x128xf32> -> vector<16x128xf32>
    %c0_3 = arith.constant 0 : index
    %c0_4 = arith.constant 0 : index
    %3 = vector.load %arg3[%c0_3, %c0_4] : memref<1x128xf32, #tpu.memory_space<vmem>>, vector<1x128xf32>
    %4 = vector.broadcast %3 : vector<1x128xf32> to vector<16x128xf32>
    %5 = arith.addf %2, %4 : vector<16x128xf32>
    %6 = math.tanh %5 : vector<16x128xf32>
    %c0_5 = arith.constant 0 : index
    %c0_6 = arith.constant 0 : index
    %7 = vector.load %arg4[%c0_5, %c0_6] : memref<128x64xf32, #tpu.memory_space<vmem>>, vector<128x64xf32>
    %cst_7 = arith.constant dense<0.000000e+00> : vector<16x64xf32>
    %8 = tpu.matmul %6, %7, %cst_7 {dimension_numbers = #tpu.dot_dimension_numbers<[1], [0], [0], [1], [0, 0, 1, 1], [], []>} : vector<16x128xf32>, vector<128x64xf32>, vector<16x64xf32> -> vector<16x64xf32>
    %c0_8 = arith.constant 0 : index
    %c0_9 = arith.constant 0 : index
    %9 = vector.load %arg5[%c0_8, %c0_9] : memref<1x64xf32, #tpu.memory_space<vmem>>, vector<1x64xf32>
    %10 = vector.broadcast %9 : vector<1x64xf32> to vector<16x64xf32>
    %11 = arith.addf %8, %10 : vector<16x64xf32>
    %12 = math.tanh %11 : vector<16x64xf32>
    %c0_10 = arith.constant 0 : index
    %c0_11 = arith.constant 0 : index
    %13 = vector.load %arg6[%c0_10, %c0_11] : memref<64x8xf32, #tpu.memory_space<vmem>>, vector<64x8xf32>
    %cst_12 = arith.constant dense<0.000000e+00> : vector<16x8xf32>
    %14 = tpu.matmul %12, %13, %cst_12 {dimension_numbers = #tpu.dot_dimension_numbers<[1], [0], [0], [1], [0, 0, 1, 1], [], []>} : vector<16x64xf32>, vector<64x8xf32>, vector<16x8xf32> -> vector<16x8xf32>
    %cst_13 = arith.constant dense<0xFF800000> : vector<16xf32>
    %15 = vector.multi_reduction <maximumf>, %14, %cst_13 [1] : vector<16x8xf32> to vector<16xf32>
    %16 = vector.shape_cast %15 : vector<16xf32> to vector<16x1xf32>
    %17 = vector.broadcast %16 : vector<16x1xf32> to vector<16x8xf32>
    %18 = arith.subf %14, %17 : vector<16x8xf32>
    %19 = math.exp %18 : vector<16x8xf32>
    %cst_14 = arith.constant dense<0.000000e+00> : vector<16xf32>
    %20 = vector.multi_reduction <add>, %19, %cst_14 [1] : vector<16x8xf32> to vector<16xf32>
    %21 = vector.shape_cast %20 : vector<16xf32> to vector<16x1xf32>
    %22 = tpu.reciprocal %21 : vector<16x1xf32> -> vector<16x1xf32>
    %23 = vector.broadcast %22 : vector<16x1xf32> to vector<16x8xf32>
    %24 = arith.mulf %19, %23 : vector<16x8xf32>
    %c0_15 = arith.constant 0 : index
    %c0_16 = arith.constant 0 : index
    %25 = vector.load %arg7[%c0_15, %c0_16] : memref<8x256xf32, #tpu.memory_space<vmem>>, vector<8x256xf32>
    %cst_17 = arith.constant dense<0.000000e+00> : vector<16x256xf32>
    %26 = tpu.matmul %24, %25, %cst_17 {dimension_numbers = #tpu.dot_dimension_numbers<[1], [0], [0], [1], [0, 0, 1, 1], [], []>} : vector<16x8xf32>, vector<8x256xf32>, vector<16x256xf32> -> vector<16x256xf32>
    %27 = arith.mulf %26, %0 : vector<16x256xf32>
    %c0_18 = arith.constant 0 : index
    %c0_19 = arith.constant 0 : index
    %28 = vector.load %arg8[%c0_18, %c0_19] : memref<256x32xf32, #tpu.memory_space<vmem>>, vector<256x32xf32>
    %cst_20 = arith.constant dense<0.000000e+00> : vector<16x32xf32>
    %29 = tpu.matmul %27, %28, %cst_20 {dimension_numbers = #tpu.dot_dimension_numbers<[1], [0], [0], [1], [0, 0, 1, 1], [], []>} : vector<16x256xf32>, vector<256x32xf32>, vector<16x32xf32> -> vector<16x32xf32>
    %c0_21 = arith.constant 0 : index
    %c0_22 = arith.constant 0 : index
    %30 = vector.load %arg9[%c0_21, %c0_22] : memref<16x32xf32, #tpu.memory_space<vmem>>, vector<16x32xf32>
    tpu.vector_store %arg9[%c0_21, %c0_22], %29 {strides = array<i32>} : memref<16x32xf32, #tpu.memory_space<vmem>>, vector<16x32xf32>,
    return
  }
  func.func @transform_0(%arg0: i32) -> (i32, i32) {
    %c0_i32 = arith.constant 0 : i32
    %c0_i32_0 = arith.constant 0 : i32
    return %arg0, %c0_i32 : i32, i32
  }
  func.func @transform_1(%arg0: i32) -> (i32, i32) {
    %c0_i32 = arith.constant 0 : i32
    %c0_i32_0 = arith.constant 0 : i32
    %c0_i32_1 = arith.constant 0 : i32
    return %c0_i32, %c0_i32_0 : i32, i32
  }
  func.func @transform_2(%arg0: i32) -> (i32, i32) {
    %c0_i32 = arith.constant 0 : i32
    %c0_i32_0 = arith.constant 0 : i32
    %c0_i32_1 = arith.constant 0 : i32
    return %c0_i32, %c0_i32_0 : i32, i32
  }
  func.func @transform_3(%arg0: i32) -> (i32, i32) {
    %c0_i32 = arith.constant 0 : i32
    %c0_i32_0 = arith.constant 0 : i32
    %c0_i32_1 = arith.constant 0 : i32
    return %c0_i32, %c0_i32_0 : i32, i32
  }
  func.func @transform_4(%arg0: i32) -> (i32, i32) {
    %c0_i32 = arith.constant 0 : i32
    %c0_i32_0 = arith.constant 0 : i32
    %c0_i32_1 = arith.constant 0 : i32
    return %c0_i32, %c0_i32_0 : i32, i32
  }
  func.func @transform_5(%arg0: i32) -> (i32, i32) {
    %c0_i32 = arith.constant 0 : i32
    %c0_i32_0 = arith.constant 0 : i32
    %c0_i32_1 = arith.constant 0 : i32
    return %c0_i32, %c0_i32_0 : i32, i32
  }
  func.func @transform_6(%arg0: i32) -> (i32, i32) {
    %c0_i32 = arith.constant 0 : i32
    %c0_i32_0 = arith.constant 0 : i32
    %c0_i32_1 = arith.constant 0 : i32
    return %c0_i32, %c0_i32_0 : i32, i32
  }
  func.func @transform_7(%arg0: i32) -> (i32, i32) {
    %c0_i32 = arith.constant 0 : i32
    %c0_i32_0 = arith.constant 0 : i32
    %c0_i32_1 = arith.constant 0 : i32
    return %c0_i32, %c0_i32_0 : i32, i32
  }
  func.func @transform_8(%arg0: i32) -> (i32, i32) {
    %c0_i32 = arith.constant 0 : i32
    %c0_i32_0 = arith.constant 0 : i32
    return %arg0, %c0_i32 : i32, i32
  }
}

</mosaic_0001>

<llo_original>
// kernel: tpu_custom_call.1
$region0: #{tpu_custom_call.1}
  #allocation0 [shape = 'u32[]', space=smem, size = 0x4, offset = 0x4, fixed_abs, tag = 'smem constant byte address 0x4 - core index']
  #allocation1 [shape = 'u32[144,128]{1,0:T(1,128)}', space=vmem, size = 0x12000, scoped, tag = 'internal scratch']
  %s0 = inlined_call_operand.vmem [shape: f32[32,256], index: 0, kind: input, shape index: {}]
  %s1 = inlined_call_operand.vmem [shape: f32[256,128], index: 1, kind: input, shape index: {}]
  %s2 = inlined_call_operand.vmem [shape: f32[1,128], index: 2, kind: input, shape index: {}]
  %s3 = inlined_call_operand.vmem [shape: f32[128,64], index: 3, kind: input, shape index: {}]
  %s4 = inlined_call_operand.vmem [shape: f32[1,64], index: 4, kind: input, shape index: {}]
  %s5 = inlined_call_operand.vmem [shape: f32[64,8], index: 5, kind: input, shape index: {}]
  %s6 = inlined_call_operand.vmem [shape: f32[8,256], index: 6, kind: input, shape index: {}]
  %s7 = inlined_call_operand.vmem [shape: f32[256,32], index: 7, kind: input, shape index: {}]
  %s8 = inlined_call_operand.hbm [shape: f32[32,32], index: 8, kind: output, shape index: {}]
  %s9 = sld [smem:[#allocation0]]
  $region65: #{tpu_custom_call.1} parent=0
    _
  %s11 = ssub.s32 1, %s9
  %s12 = scalar_select 0, %s11, %s9
  $region1: #{tpu_custom_call.1} parent=0
    #allocation2 [shape = 'u8[16384]{0}', space=vmem, size = 0x4000, scoped, tag = 'output window, operand 0']
    #allocation3 [shape = 's32[2]{0}', space=sflag, size = 0x8, scoped, tag = 'scoped memory for tpu_custom_call.1']
    %13 = vsyncpa [#allocation3], 0
    %s14 = scalar_lea.sflag [#allocation3], 1
    %15 = vsyncpa %s14, 0
    loop: start=0, step=1, limit=4
    $region2: #{tpu_custom_call.1} parent=1 // loop_pre_header
      _
    $region3: #{tpu_custom_call.1} parent=1 // loop_header
      %s17 = sphi 0, %s21
      %p18 = scmp.ge.s32.totalorder %s17, 4
      %s27 = sphi 0, %s29
      %s30 = sphi 0, %s27
      %s31 = sphi 0, %s30
      %s47 = sphi 0, %s31
      %s51 = sphi 0, %s51
      %s53 = sphi 0, %s51
      %s54 = sphi 0, %s53
      %s68 = sphi 0, %s54
      %s72 = sphi 0, %s72
      %s74 = sphi 0, %s72
      %s75 = sphi 0, %s74
      %s89 = sphi 0, %s75
      %s93 = sphi 0, %s93
      %s95 = sphi 0, %s93
      %s96 = sphi 0, %s95
      %s110 = sphi 0, %s96
      %s114 = sphi 0, %s114
      %s116 = sphi 0, %s114
      %s117 = sphi 0, %s116
      %s131 = sphi 0, %s117
      %s135 = sphi 0, %s135
      %s137 = sphi 0, %s135
      %s138 = sphi 0, %s137
      %s152 = sphi 0, %s138
      %s156 = sphi 0, %s156
      %s158 = sphi 0, %s156
      %s159 = sphi 0, %s158
      %s173 = sphi 0, %s159
      %s177 = sphi 0, %s177
      %s179 = sphi 0, %s177
      %s180 = sphi 0, %s179
      %s194 = sphi 0, %s180
      %s200 = sphi 0, %s202
      %s203 = sphi 0, %s200
      %s204 = sphi 0, %s203
      %s220 = sphi 0, %s204
    $region4: #{tpu_custom_call.1} parent=1 // loop_header_branch
      %20 = sbr.rel (%p18) target = $region8
    $region5: #{tpu_custom_call.1} parent=1 // loop_body
      %s22 = ssub.s32 %s17, 1
      %s23 = ssub.s32 %s17, 2
      %s24 = sadd.s32 %s17, 1
      %s25 = ssub.s32 %s17, %s24
      %p26 = scmp.eq.s32.totalorder %s25, 0
      %s28 = sadd.s32 %s27, 1
      %s29 = scalar_select %p26, %s27, %s28
      %p32 = pneg %p26
      %p33 = scmp.eq.s32.totalorder %s17, 1
      %p34 = por %p32, %p33
      %p35 = scmp.ne.s32.totalorder %s27, %s30
      %p36 = scmp.eq.s32.totalorder %s17, 0
      %p37 = por %p35, %p36
      %p38 = scmp.ne.s32.totalorder %s27, %s30
      %p39 = scmp.eq.s32.totalorder %s22, 1
      %p40 = por %p38, %p39
      %p41 = scmp.ne.s32.totalorder %s30, %s31
      %p42 = scmp.eq.s32.totalorder %s22, 0
      %p43 = por %p41, %p42
      %p44 = scmp.ne.s32.totalorder %s30, %s31
      %p45 = scmp.eq.s32.totalorder %s23, 1
      %p46 = por %p44, %p45
      %p48 = scmp.ne.s32.totalorder %s31, %s47
      %p49 = scmp.eq.s32.totalorder %s23, 0
      %p50 = por %p48, %p49
      %s52 = sadd.s32 %s51, 1
      %p55 = scmp.eq.s32.totalorder %s17, 1
      %p56 = scmp.ne.s32.totalorder %s51, %s53
      %p57 = scmp.eq.s32.totalorder %s17, 0
      %p58 = por %p56, %p57
      %p59 = scmp.ne.s32.totalorder %s51, %s53
      %p60 = scmp.eq.s32.totalorder %s22, 1
      %p61 = por %p59, %p60
      %p62 = scmp.ne.s32.totalorder %s53, %s54
      %p63 = scmp.eq.s32.totalorder %s22, 0
      %p64 = por %p62, %p63
      %p65 = scmp.ne.s32.totalorder %s53, %s54
      %p66 = scmp.eq.s32.totalorder %s23, 1
      %p67 = por %p65, %p66
      %p69 = scmp.ne.s32.totalorder %s54, %s68
      %p70 = scmp.eq.s32.totalorder %s23, 0
      %p71 = por %p69, %p70
      %s73 = sadd.s32 %s72, 1
      %p76 = scmp.eq.s32.totalorder %s17, 1
      %p77 = scmp.ne.s32.totalorder %s72, %s74
      %p78 = scmp.eq.s32.totalorder %s17, 0
      %p79 = por %p77, %p78
      %p80 = scmp.ne.s32.totalorder %s72, %s74
      %p81 = scmp.eq.s32.totalorder %s22, 1
      %p82 = por %p80, %p81
      %p83 = scmp.ne.s32.totalorder %s74, %s75
      %p84 = scmp.eq.s32.totalorder %s22, 0
      %p85 = por %p83, %p84
      %p86 = scmp.ne.s32.totalorder %s74, %s75
      %p87 = scmp.eq.s32.totalorder %s23, 1
      %p88 = por %p86, %p87
      %p90 = scmp.ne.s32.totalorder %s75, %s89
      %p91 = scmp.eq.s32.totalorder %s23, 0
      %p92 = por %p90, %p91
      %s94 = sadd.s32 %s93, 1
      %p97 = scmp.eq.s32.totalorder %s17, 1
      %p98 = scmp.ne.s32.totalorder %s93, %s95
      %p99 = scmp.eq.s32.totalorder %s17, 0
      %p100 = por %p98, %p99
      %p101 = scmp.ne.s32.totalorder %s93, %s95
      %p102 = scmp.eq.s32.totalorder %s22, 1
      %p103 = por %p101, %p102
      %p104 = scmp.ne.s32.totalorder %s95, %s96
      %p105 = scmp.eq.s32.totalorder %s22, 0
      %p106 = por %p104, %p105
      %p107 = scmp.ne.s32.totalorder %s95, %s96
      %p108 = scmp.eq.s32.totalorder %s23, 1
      %p109 = por %p107, %p108
      %p111 = scmp.ne.s32.totalorder %s96, %s110
      %p112 = scmp.eq.s32.totalorder %s23, 0
      %p113 = por %p111, %p112
      %s115 = sadd.s32 %s114, 1
      %p118 = scmp.eq.s32.totalorder %s17, 1
      %p119 = scmp.ne.s32.totalorder %s114, %s116
      %p120 = scmp.eq.s32.totalorder %s17, 0
      %p121 = por %p119, %p120
      %p122 = scmp.ne.s32.totalorder %s114, %s116
      %p123 = scmp.eq.s32.totalorder %s22, 1
      %p124 = por %p122, %p123
      %p125 = scmp.ne.s32.totalorder %s116, %s117
      %p126 = scmp.eq.s32.totalorder %s22, 0
      %p127 = por %p125, %p126
      %p128 = scmp.ne.s32.totalorder %s116, %s117
      %p129 = scmp.eq.s32.totalorder %s23, 1
      %p130 = por %p128, %p129
      %p132 = scmp.ne.s32.totalorder %s117, %s131
      %p133 = scmp.eq.s32.totalorder %s23, 0
      %p134 = por %p132, %p133
      %s136 = sadd.s32 %s135, 1
      %p139 = scmp.eq.s32.totalorder %s17, 1
      %p140 = scmp.ne.s32.totalorder %s135, %s137
      %p141 = scmp.eq.s32.totalorder %s17, 0
      %p142 = por %p140, %p141
      %p143 = scmp.ne.s32.totalorder %s135, %s137
      %p144 = scmp.eq.s32.totalorder %s22, 1
      %p145 = por %p143, %p144
      %p146 = scmp.ne.s32.totalorder %s137, %s138
      %p147 = scmp.eq.s32.totalorder %s22, 0
      %p148 = por %p146, %p147
      %p149 = scmp.ne.s32.totalorder %s137, %s138
      %p150 = scmp.eq.s32.totalorder %s23, 1
      %p151 = por %p149, %p150
      %p153 = scmp.ne.s32.totalorder %s138, %s152
      %p154 = scmp.eq.s32.totalorder %s23, 0
      %p155 = por %p153, %p154
      %s157 = sadd.s32 %s156, 1
      %p160 = scmp.eq.s32.totalorder %s17, 1
      %p161 = scmp.ne.s32.totalorder %s156, %s158
      %p162 = scmp.eq.s32.totalorder %s17, 0
      %p163 = por %p161, %p162
      %p164 = scmp.ne.s32.totalorder %s156, %s158
      %p165 = scmp.eq.s32.totalorder %s22, 1
      %p166 = por %p164, %p165
      %p167 = scmp.ne.s32.totalorder %s158, %s159
      %p168 = scmp.eq.s32.totalorder %s22, 0
      %p169 = por %p167, %p168
      %p170 = scmp.ne.s32.totalorder %s158, %s159
      %p171 = scmp.eq.s32.totalorder %s23, 1
      %p172 = por %p170, %p171
      %p174 = scmp.ne.s32.totalorder %s159, %s173
      %p175 = scmp.eq.s32.totalorder %s23, 0
      %p176 = por %p174, %p175
      %s178 = sadd.s32 %s177, 1
      %p181 = scmp.eq.s32.totalorder %s17, 1
      %p182 = scmp.ne.s32.totalorder %s177, %s179
      %p183 = scmp.eq.s32.totalorder %s17, 0
      %p184 = por %p182, %p183
      %p185 = scmp.ne.s32.totalorder %s177, %s179
      %p186 = scmp.eq.s32.totalorder %s22, 1
      %p187 = por %p185, %p186
      %p188 = scmp.ne.s32.totalorder %s179, %s180
      %p189 = scmp.eq.s32.totalorder %s22, 0
      %p190 = por %p188, %p189
      %p191 = scmp.ne.s32.totalorder %s179, %s180
      %p192 = scmp.eq.s32.totalorder %s23, 1
      %p193 = por %p191, %p192
      %p195 = scmp.ne.s32.totalorder %s180, %s194
      %p196 = scmp.eq.s32.totalorder %s23, 0
      %p197 = por %p195, %p196
      %s198 = ssub.s32 %s17, %s24
      %p199 = scmp.eq.s32.totalorder %s198, 0
      %s201 = sadd.s32 %s200, 1
      %s202 = scalar_select %p199, %s200, %s201
      %p205 = pneg %p199
      %p206 = scmp.eq.s32.totalorder %s17, 1
      %p207 = por %p205, %p206
      %p208 = scmp.ne.s32.totalorder %s200, %s203
      %p209 = scmp.eq.s32.totalorder %s17, 0
      %p210 = por %p208, %p209
      %p211 = scmp.ne.s32.totalorder %s200, %s203
      %p212 = scmp.eq.s32.totalorder %s22, 1
      %p213 = por %p211, %p212
      %p214 = scmp.ne.s32.totalorder %s203, %s204
      %p215 = scmp.eq.s32.totalorder %s22, 0
      %p216 = por %p214, %p215
      %p217 = scmp.ne.s32.totalorder %s203, %s204
      %p218 = scmp.eq.s32.totalorder %s23, 1
      %p219 = por %p217, %p218
      %p221 = scmp.ne.s32.totalorder %s204, %s220
      %p222 = scmp.eq.s32.totalorder %s23, 0
      %p223 = por %p221, %p222
      %p224 = scmp.le.s32.totalorder 1, %s17
      %p225 = scmp.lt.s32.totalorder %s17, 3
      %p226 = pnand %p224, %p225
      %p227 = pneg %p226
      // Predicated region
      $region9: #{tpu_custom_call.1} parent=5 // pred_check
        _
      $region10: #{tpu_custom_call.1} parent=5 // pred_check_branch
        %229 = sbr.rel (%p226) target = $region12
      $region11: #{tpu_custom_call.1} parent=5 // pred_region
        %s230 = ssub.s32 %s17, 1
        // Predicated region
        $region13: #{tpu_custom_call.1} parent=11 // pred_check
          %p231 = pneg %p64
        $region14: #{tpu_custom_call.1} parent=11 // pred_check_branch
          %233 = sbr.rel (%p231) target = $region16
        $region15: #{tpu_custom_call.1} parent=11 // pred_region
          _
        $region16: #{tpu_custom_call.1} parent=11 // pred_fallthru
          _
        // Predicated region
        $region17: #{tpu_custom_call.1} parent=11 // pred_check
          %p234 = pneg %p85
        $region18: #{tpu_custom_call.1} parent=11 // pred_check_branch
          %236 = sbr.rel (%p234) target = $region20
        $region19: #{tpu_custom_call.1} parent=11 // pred_region
          _
        $region20: #{tpu_custom_call.1} parent=11 // pred_fallthru
          _
        // Predicated region
        $region21: #{tpu_custom_call.1} parent=11 // pred_check
          %p237 = pneg %p106
        $region22: #{tpu_custom_call.1} parent=11 // pred_check_branch
          %239 = sbr.rel (%p237) target = $region24
        $region23: #{tpu_custom_call.1} parent=11 // pred_region
          _
        $region24: #{tpu_custom_call.1} parent=11 // pred_fallthru
          _
        // Predicated region
        $region25: #{tpu_custom_call.1} parent=11 // pred_check
          %p240 = pneg %p127
        $region26: #{tpu_custom_call.1} parent=11 // pred_check_branch
          %242 = sbr.rel (%p240) target = $region28
        $region27: #{tpu_custom_call.1} parent=11 // pred_region
          _
        $region28: #{tpu_custom_call.1} parent=11 // pred_fallthru
          _
        // Predicated region
        $region29: #{tpu_custom_call.1} parent=11 // pred_check
          %p243 = pneg %p148
        $region30: #{tpu_custom_call.1} parent=11 // pred_check_branch
          %245 = sbr.rel (%p243) target = $region32
        $region31: #{tpu_custom_call.1} parent=11 // pred_region
          _
        $region32: #{tpu_custom_call.1} parent=11 // pred_fallthru
          _
        // Predicated region
        $region33: #{tpu_custom_call.1} parent=11 // pred_check
          %p246 = pneg %p169
        $region34: #{tpu_custom_call.1} parent=11 // pred_check_branch
          %248 = sbr.rel (%p246) target = $region36
        $region35: #{tpu_custom_call.1} parent=11 // pred_region
          _
        $region36: #{tpu_custom_call.1} parent=11 // pred_fallthru
          _
        // Predicated region
        $region37: #{tpu_custom_call.1} parent=11 // pred_check
          %p249 = pneg %p190
        $region38: #{tpu_custom_call.1} parent=11 // pred_check_branch
          %251 = sbr.rel (%p249) target = $region40
        $region39: #{tpu_custom_call.1} parent=11 // pred_region
          _
        $region40: #{tpu_custom_call.1} parent=11 // pred_fallthru
          _
      $region12: #{tpu_custom_call.1} parent=5 // pred_fallthru
        _
      %p252 = scmp.lt.s32.totalorder %s17, 2
      // Predicated region
      $region41: #{tpu_custom_call.1} parent=5 // pred_check
        %p253 = pneg %p252
      $region42: #{tpu_custom_call.1} parent=5 // pred_check_branch
        %255 = sbr.rel (%p253) target = $region44
      $region43: #{tpu_custom_call.1} parent=5 // pred_region
        // Predicated region
        $region45: #{tpu_custom_call.1} parent=43 // pred_check
          %p256 = pneg %p37
        $region46: #{tpu_custom_call.1} parent=43 // pred_check_branch
          %258 = sbr.rel (%p256) target = $region48
        $region47: #{tpu_custom_call.1} parent=43 // pred_region
          %s259 = smul.u32 2, %s17
          %p260 = scmp.lt.s32.totalorder %s259, 3
          %s261 = scalar_select %p260, %s259, 3
          %s262 = smul.addr %s261, 2
          %s263 = smul.addr %s262, 8
          %s264 = scalar_lea.vmem %s0, %s263
          %s265 = smul.u32 2, %s17
        $region48: #{tpu_custom_call.1} parent=43 // pred_fallthru
          _
      $region44: #{tpu_custom_call.1} parent=5 // pred_fallthru
        _
      %p266 = scmp.le.s32.totalorder 1, %s17
      %p267 = scmp.lt.s32.totalorder %s17, 3
      %p268 = pnand %p266, %p267
      %p269 = pneg %p268
      // Predicated region
      $region49: #{tpu_custom_call.1} parent=5 // pred_check
        _
      $region50: #{tpu_custom_call.1} parent=5 // pred_check_branch
        %271 = sbr.rel (%p268) target = $region52
      $region51: #{tpu_custom_call.1} parent=5 // pred_region
        %s272 = ssub.s32 %s17, 1
        %s273 = smul.u32 2, %s22
        %p274 = scmp.lt.s32.totalorder %s273, 3
        %s275 = scalar_select %p274, %s273, 3
        %s276 = smul.addr %s275, 2
        %s277 = smul.addr %s276, 8
        %s278 = scalar_lea.vmem %s0, %s277
        %p279 = pneg %p43
        %p280 = pneg %p40
        %p281 = pneg %p64
        %p282 = pneg %p61
        %p283 = pneg %p85
        %p284 = pneg %p82
        %p285 = pneg %p106
        %p286 = pneg %p103
        %p287 = pneg %p127
        %p288 = pneg %p124
        %p289 = pneg %p148
        %p290 = pneg %p145
        %p291 = pneg %p169
        %p292 = pneg %p166
        %p293 = pneg %p190
        %p294 = pneg %p187
        %p295 = pneg %p216
        %p296 = pneg %p213
        %s297 = sand.u32 %s203, 1
        %s298 = scalar_lea.sflag [#allocation3], %s297
        %s299 = sand.u32 %s203, 1
        %s300 = smul.addr %s299, 16
        %s301 = scalar_lea.vmem [#allocation2], %s300
        %s302 = smul.u32 2, %s22
        %p303 = scmp.lt.s32.totalorder %s302, 3
        %s304 = scalar_select %p303, %s302, 3
        %s305 = smul.addr %s304, 2
        %s306 = smul.addr %s305, 8
        %s307 = scalar_lea.vmem %s0, %s306
        %s308 = smul.u32 2, %s22
        %s309 = smul.u32 2, %s22
        %v310 = vld [vmem:[%s307] sm:$0xff]
        %v311 = vld [vmem:[%s307 + $0x8] sm:$0xff]
        %v312 = vld [vmem:[%s307 + $0x10] sm:$0xff]
        %v313 = vld [vmem:[%s307 + $0x18] sm:$0xff]
        %v314 = vld [vmem:[%s1] sm:$0xff]
        %v315 = vld [vmem:[%s1 + $0x8] sm:$0xff]
        %v316 = vld [vmem:[%s1 + $0x10] sm:$0xff]
        %v317 = vld [vmem:[%s1 + $0x18] sm:$0xff]
        %v318 = vld [vmem:[%s1 + $0x20] sm:$0xff]
        %v319 = vld [vmem:[%s1 + $0x28] sm:$0xff]
        %v320 = vld [vmem:[%s1 + $0x30] sm:$0xff]
        %v321 = vld [vmem:[%s1 + $0x38] sm:$0xff]
        %v322 = vld [vmem:[%s1 + $0x40] sm:$0xff]
        %v323 = vld [vmem:[%s1 + $0x48] sm:$0xff]
        %v324 = vld [vmem:[%s1 + $0x50] sm:$0xff]
        %v325 = vld [vmem:[%s1 + $0x58] sm:$0xff]
        %v326 = vld [vmem:[%s1 + $0x60] sm:$0xff]
        %v327 = vld [vmem:[%s1 + $0x68] sm:$0xff]
        %v328 = vld [vmem:[%s1 + $0x70] sm:$0xff]
        %v329 = vld [vmem:[%s1 + $0x78] sm:$0xff]
        %v330 = vld [vmem:[%s1 + $0x80] sm:$0xff]
        %v331 = vld [vmem:[%s1 + $0x88] sm:$0xff]
        %v332 = vld [vmem:[%s1 + $0x90] sm:$0xff]
        %v333 = vld [vmem:[%s1 + $0x98] sm:$0xff]
        %v334 = vld [vmem:[%s1 + $0xa0] sm:$0xff]
        %v335 = vld [vmem:[%s1 + $0xa8] sm:$0xff]
        %v336 = vld [vmem:[%s1 + $0xb0] sm:$0xff]
        %v337 = vld [vmem:[%s1 + $0xb8] sm:$0xff]
        %v338 = vld [vmem:[%s1 + $0xc0] sm:$0xff]
        %v339 = vld [vmem:[%s1 + $0xc8] sm:$0xff]
        %v340 = vld [vmem:[%s1 + $0xd0] sm:$0xff]
        %v341 = vld [vmem:[%s1 + $0xd8] sm:$0xff]
        %v342 = vld [vmem:[%s1 + $0xe0] sm:$0xff]
        %v343 = vld [vmem:[%s1 + $0xe8] sm:$0xff]
        %v344 = vld [vmem:[%s1 + $0xf0] sm:$0xff]
        %v345 = vld [vmem:[%s1 + $0xf8] sm:$0xff]
        %v346 = vld [vmem:[%s2] sm:$0x1]
        %v348 = vlaneseq
        %v349 = vshrl.u32 %v348, 7
        %v350 = vsub.s32 0, %v349
        %v351 = vrot.slane %v346, %v350
        %353 = vmatprep.subr.mxu0 0.0
        %354 = vmatpush1.msra.mxu0 %v314
        %355 = vmatprep.subr.mxu0 0.0
        %356 = vmatpush1.msra.mxu0 %v315
        %357 = vmatprep.subr.mxu0 0.0
        %358 = vmatpush1.msra.mxu0 %v316
        %359 = vmatprep.subr.mxu0 0.0
        %360 = vmatpush1.msra.mxu0 %v317
        %361 = vmatprep.subr.mxu0 0.0
        %362 = vmatpush1.msra.mxu0 %v318
        %363 = vmatprep.subr.mxu0 0.0
        %364 = vmatpush1.msra.mxu0 %v319
        %365 = vmatprep.subr.mxu0 0.0
        %366 = vmatpush1.msra.mxu0 %v320
        %367 = vmatprep.subr.mxu0 0.0
        %368 = vmatpush1.msra.mxu0 %v321
        %369 = vmatprep.subr.mxu0 0.0
        %370 = vmatpush1.msra.mxu0 %v322
        %371 = vmatprep.subr.mxu0 0.0
        %372 = vmatpush1.msra.mxu0 %v323
        %373 = vmatprep.subr.mxu0 0.0
        %374 = vmatpush1.msra.mxu0 %v324
        %375 = vmatprep.subr.mxu0 0.0
        %376 = vmatpush1.msra.mxu0 %v325
        %377 = vmatprep.subr.mxu0 0.0
        %378 = vmatpush1.msra.mxu0 %v326
        %379 = vmatprep.subr.mxu0 0.0
        %380 = vmatpush1.msra.mxu0 %v327
        %381 = vmatprep.subr.mxu0 0.0
        %382 = vmatpush1.msra.mxu0 %v328
        %383 = vmatprep.subr.mxu0 0.0
        %384 = vmatpush1.msra.mxu0 %v329
        %385 = vmatprep.subr.mxu0 0.0
        %386 = vmatpush1.msra.mxu0 %v330
        %387 = vmatprep.subr.mxu0 0.0
        %388 = vmatpush1.msra.mxu0 %v331
        %389 = vmatprep.subr.mxu0 0.0
        %390 = vmatpush1.msra.mxu0 %v332
        %391 = vmatprep.subr.mxu0 0.0
        %392 = vmatpush1.msra.mxu0 %v333
        %393 = vmatprep.subr.mxu0 0.0
        %394 = vmatpush1.msra.mxu0 %v334
        %395 = vmatprep.subr.mxu0 0.0
        %396 = vmatpush1.msra.mxu0 %v335
        %397 = vmatprep.subr.mxu0 0.0
        %398 = vmatpush1.msra.mxu0 %v336
        %399 = vmatprep.subr.mxu0 0.0
        %400 = vmatpush1.msra.mxu0 %v337
        %401 = vmatprep.subr.mxu0 0.0
        %402 = vmatpush1.msra.mxu0 %v338
        %403 = vmatprep.subr.mxu0 0.0
        %404 = vmatpush1.msra.mxu0 %v339
        %405 = vmatprep.subr.mxu0 0.0
        %406 = vmatpush1.msra.mxu0 %v340
        %407 = vmatprep.subr.mxu0 0.0
        %408 = vmatpush1.msra.mxu0 %v341
        %409 = vmatprep.subr.mxu0 0.0
        %410 = vmatpush1.msra.mxu0 %v342
        %411 = vmatprep.subr.mxu0 0.0
        %412 = vmatpush1.msra.mxu0 %v343
        %413 = vmatprep.subr.mxu0 0.0
        %414 = vmatpush1.msra.mxu0 %v344
        %415 = vmatprep.subr.mxu0 0.0
        %416 = vmatpush1.msra.mxu0 %v345
        %417 = vmatprep.mubr.f32.mxu0 %v311
        %418 = vmatmul.mubr.f32.gmra.mrb[0].mxu0 %v310
        %v419 = vpop.f32.mrb[0].mxu0
        %v420 = vadd.f32 %v351, %v419
        %v421 = vpop.f32.mrb[0].mxu0
        %422 = vmatprep.mubr.f32.mxu0 %v313
        %423 = vmatmul.mubr.f32.gmra.mrb[0].mxu0 %v312
        %v424 = vpop.f32.mrb[0].mxu0
        %v425 = vadd.f32 %v351, %v424
        %v426 = vpop.f32.mrb[0].mxu0
        %427 = vdwg.mxu0
        %v428 = vtanh.pop %v420
        %v429 = vtanh.pop %v425
        %v430 = vld [vmem:[%s3] sm:$0xff]
        %v431 = vld [vmem:[%s3 + $0x8] sm:$0xff]
        %v432 = vld [vmem:[%s3 + $0x10] sm:$0xff]
        %v433 = vld [vmem:[%s3 + $0x18] sm:$0xff]
        %v434 = vld [vmem:[%s3 + $0x20] sm:$0xff]
        %v435 = vld [vmem:[%s3 + $0x28] sm:$0xff]
        %v436 = vld [vmem:[%s3 + $0x30] sm:$0xff]
        %v437 = vld [vmem:[%s3 + $0x38] sm:$0xff]
        %v438 = vld [vmem:[%s3 + $0x40] sm:$0xff]
        %v439 = vld [vmem:[%s3 + $0x48] sm:$0xff]
        %v440 = vld [vmem:[%s3 + $0x50] sm:$0xff]
        %v441 = vld [vmem:[%s3 + $0x58] sm:$0xff]
        %v442 = vld [vmem:[%s3 + $0x60] sm:$0xff]
        %v443 = vld [vmem:[%s3 + $0x68] sm:$0xff]
        %v444 = vld [vmem:[%s3 + $0x70] sm:$0xff]
        %v445 = vld [vmem:[%s3 + $0x78] sm:$0xff]
        %v446 = vld [vmem:[%s4] sm:$0x1]
        %v448 = vlaneseq
        %v449 = vshrl.u32 %v448, 7
        %v450 = vsub.s32 0, %v449
        %v451 = vrot.slane %v446, %v450
        %453 = vmatprep.subr.mxu0 0.0
        %454 = vmatpush1.msra.mxu0 %v430
        %455 = vmatprep.subr.mxu0 0.0
        %456 = vmatpush1.msra.mxu0 %v431
        %457 = vmatprep.subr.mxu0 0.0
        %458 = vmatpush1.msra.mxu0 %v432
        %459 = vmatprep.subr.mxu0 0.0
        %460 = vmatpush1.msra.mxu0 %v433
        %461 = vmatprep.subr.mxu0 0.0
        %462 = vmatpush1.msra.mxu0 %v434
        %463 = vmatprep.subr.mxu0 0.0
        %464 = vmatpush1.msra.mxu0 %v435
        %465 = vmatprep.subr.mxu0 0.0
        %466 = vmatpush1.msra.mxu0 %v436
        %467 = vmatprep.subr.mxu0 0.0
        %468 = vmatpush1.msra.mxu0 %v437
        %469 = vmatprep.subr.mxu0 0.0
        %470 = vmatpush1.msra.mxu0 %v438
        %471 = vmatprep.subr.mxu0 0.0
        %472 = vmatpush1.msra.mxu0 %v439
        %473 = vmatprep.subr.mxu0 0.0
        %474 = vmatpush1.msra.mxu0 %v440
        %475 = vmatprep.subr.mxu0 0.0
        %476 = vmatpush1.msra.mxu0 %v441
        %477 = vmatprep.subr.mxu0 0.0
        %478 = vmatpush1.msra.mxu0 %v442
        %479 = vmatprep.subr.mxu0 0.0
        %480 = vmatpush1.msra.mxu0 %v443
        %481 = vmatprep.subr.mxu0 0.0
        %482 = vmatpush1.msra.mxu0 %v444
        %483 = vmatprep.subr.mxu0 0.0
        %484 = vmatpush1.msra.mxu0 %v445
        %485 = vmatprep.subr.mxu0 0.0
        %486 = vmatpush1.msra.mxu0 0.0
        %487 = vmatprep.subr.mxu0 0.0
        %488 = vmatpush1.msra.mxu0 0.0
        %489 = vmatprep.subr.mxu0 0.0
        %490 = vmatpush1.msra.mxu0 0.0
        %491 = vmatprep.subr.mxu0 0.0
        %492 = vmatpush1.msra.mxu0 0.0
        %493 = vmatprep.subr.mxu0 0.0
        %494 = vmatpush1.msra.mxu0 0.0
        %495 = vmatprep.subr.mxu0 0.0
        %496 = vmatpush1.msra.mxu0 0.0
        %497 = vmatprep.subr.mxu0 0.0
        %498 = vmatpush1.msra.mxu0 0.0
        %499 = vmatprep.subr.mxu0 0.0
        %500 = vmatpush1.msra.mxu0 0.0
        %501 = vmatprep.subr.mxu0 0.0
        %502 = vmatpush1.msra.mxu0 0.0
        %503 = vmatprep.subr.mxu0 0.0
        %504 = vmatpush1.msra.mxu0 0.0
        %505 = vmatprep.subr.mxu0 0.0
        %506 = vmatpush1.msra.mxu0 0.0
        %507 = vmatprep.subr.mxu0 0.0
        %508 = vmatpush1.msra.mxu0 0.0
        %509 = vmatprep.subr.mxu0 0.0
        %510 = vmatpush1.msra.mxu0 0.0
        %511 = vmatprep.subr.mxu0 0.0
        %512 = vmatpush1.msra.mxu0 0.0
        %513 = vmatprep.subr.mxu0 0.0
        %514 = vmatpush1.msra.mxu0 0.0
        %515 = vmatprep.subr.mxu0 0.0
        %516 = vmatpush1.msra.mxu0 0.0
        %517 = vmatprep.mubr.f32.mxu0 0.0
        %518 = vmatmul.mubr.f32.gmra.mrb[0].mxu0 %v428
        %v519 = vpop.f32.mrb[0].mxu0
        %v520 = vadd.f32 %v451, %v519
        %v521 = vpop.f32.mrb[0].mxu0
        %522 = vmatprep.mubr.f32.mxu0 0.0
        %523 = vmatmul.mubr.f32.gmra.mrb[0].mxu0 %v429
        %v524 = vpop.f32.mrb[0].mxu0
        %v525 = vadd.f32 %v451, %v524
        %v526 = vpop.f32.mrb[0].mxu0
        %527 = vdwg.mxu0
        %v528 = vtanh.pop %v520
        %v529 = vtanh.pop %v525
        %v530 = vld [vmem:[%s5] sm:$0xff]
        %v531 = vld [vmem:[%s5 + $0x8] sm:$0xff]
        %v532 = vld [vmem:[%s5 + $0x10] sm:$0xff]
        %v533 = vld [vmem:[%s5 + $0x18] sm:$0xff]
        %v534 = vld [vmem:[%s5 + $0x20] sm:$0xff]
        %v535 = vld [vmem:[%s5 + $0x28] sm:$0xff]
        %v536 = vld [vmem:[%s5 + $0x30] sm:$0xff]
        %v537 = vld [vmem:[%s5 + $0x38] sm:$0xff]
        %vm538 = vcmask 523264
        %v540 = vsel %vm538, %v528, 0
        %v543 = vsel %vm538, %v529, 0
        %545 = vmatprep.subr.mxu0 0.0
        %546 = vmatpush1.msra.mxu0 %v530
        %547 = vmatprep.subr.mxu0 0.0
        %548 = vmatpush1.msra.mxu0 %v531
        %549 = vmatprep.subr.mxu0 0.0
        %550 = vmatpush1.msra.mxu0 %v532
        %551 = vmatprep.subr.mxu0 0.0
        %552 = vmatpush1.msra.mxu0 %v533
        %553 = vmatprep.subr.mxu0 0.0
        %554 = vmatpush1.msra.mxu0 %v534
        %555 = vmatprep.subr.mxu0 0.0
        %556 = vmatpush1.msra.mxu0 %v535
        %557 = vmatprep.subr.mxu0 0.0
        %558 = vmatpush1.msra.mxu0 %v536
        %559 = vmatprep.subr.mxu0 0.0
        %560 = vmatpush1.msra.mxu0 %v537
        %561 = vmatprep.subr.mxu0 0.0
        %562 = vmatpush1.msra.mxu0 0.0
        %563 = vmatprep.subr.mxu0 0.0
        %564 = vmatpush1.msra.mxu0 0.0
        %565 = vmatprep.subr.mxu0 0.0
        %566 = vmatpush1.msra.mxu0 0.0
        %567 = vmatprep.subr.mxu0 0.0
        %568 = vmatpush1.msra.mxu0 0.0
        %569 = vmatprep.subr.mxu0 0.0
        %570 = vmatpush1.msra.mxu0 0.0
        %571 = vmatprep.subr.mxu0 0.0
        %572 = vmatpush1.msra.mxu0 0.0
        %573 = vmatprep.subr.mxu0 0.0
        %574 = vmatpush1.msra.mxu0 0.0
        %575 = vmatprep.subr.mxu0 0.0
        %576 = vmatpush1.msra.mxu0 0.0
        %577 = vmatprep.subr.mxu0 0.0
        %578 = vmatpush1.msra.mxu0 0.0
        %579 = vmatprep.subr.mxu0 0.0
        %580 = vmatpush1.msra.mxu0 0.0
        %581 = vmatprep.subr.mxu0 0.0
        %582 = vmatpush1.msra.mxu0 0.0
        %583 = vmatprep.subr.mxu0 0.0
        %584 = vmatpush1.msra.mxu0 0.0
        %585 = vmatprep.subr.mxu0 0.0
        %586 = vmatpush1.msra.mxu0 0.0
        %587 = vmatprep.subr.mxu0 0.0
        %588 = vmatpush1.msra.mxu0 0.0
        %589 = vmatprep.subr.mxu0 0.0
        %590 = vmatpush1.msra.mxu0 0.0
        %591 = vmatprep.subr.mxu0 0.0
        %592 = vmatpush1.msra.mxu0 0.0
        %593 = vmatprep.subr.mxu0 0.0
        %594 = vmatpush1.msra.mxu0 0.0
        %595 = vmatprep.subr.mxu0 0.0
        %596 = vmatpush1.msra.mxu0 0.0
        %597 = vmatprep.subr.mxu0 0.0
        %598 = vmatpush1.msra.mxu0 0.0
        %599 = vmatprep.subr.mxu0 0.0
        %600 = vmatpush1.msra.mxu0 0.0
        %601 = vmatprep.subr.mxu0 0.0
        %602 = vmatpush1.msra.mxu0 0.0
        %603 = vmatprep.subr.mxu0 0.0
        %604 = vmatpush1.msra.mxu0 0.0
        %605 = vmatprep.subr.mxu0 0.0
        %606 = vmatpush1.msra.mxu0 0.0
        %607 = vmatprep.subr.mxu0 0.0
        %608 = vmatpush1.msra.mxu0 0.0
        %609 = vmatprep.mubr.f32.mxu0 0.0
        %610 = vmatmul.mubr.f32.gmra.mrb[0].mxu0 %v540
        %v611 = vpop.f32.mrb[0].mxu0
        %v612 = vadd.f32 0.0, %v611
        %v613 = vpop.f32.mrb[0].mxu0
        %614 = vmatprep.mubr.f32.mxu0 0.0
        %615 = vmatmul.mubr.f32.gmra.mrb[0].mxu0 %v543
        %v616 = vpop.f32.mrb[0].mxu0
        %v617 = vadd.f32 0.0, %v616
        %v618 = vpop.f32.mrb[0].mxu0
        %619 = vdwg.mxu0
        %vm620 = vcmask 64512
        %v621 = vsel %vm620, %v612, -inf
        %622 = vmax.xlane.f32.xlu0 %v621
        %v623 = vpop.xlane.xlu0 %622
        %v624 = vsel %vm620, %v617, -inf
        %625 = vmax.xlane.f32.xlu0 %v624
        %v626 = vpop.xlane.xlu0 %625
        %v627 = vsub.f32 %v612, %v623
        %v628 = vsub.f32 %v617, %v626
        %v629 = vmul.f32 %v627, 1.442695
        %v630 = vpow.pop %v629
        %v631 = vmul.f32 %v628, 1.442695
        %v632 = vpow.pop %v631
        %v633 = vsel %vm620, %v630, 0.0
        %634 = vadd.xlane.f32.xlu0 %v633
        %v635 = vpop.xlane.xlu0 %634
        %v636 = vsel %vm620, %v632, 0.0
        %637 = vadd.xlane.f32.xlu0 %v636
        %v638 = vpop.xlane.xlu0 %637
        %v639 = vrcp.pop %v635
        %v640 = vrcp.pop %v638
        %v641 = vmul.f32 %v630, %v639
        %v642 = vmul.f32 %v632, %v640
        %v643 = vld [vmem:[%s6] sm:$0xff]
        %v644 = vld [vmem:[%s6 + $0x8] sm:$0xff]
        %v646 = vsel %vm620, %v641, 0
        %v649 = vsel %vm620, %v642, 0
        %651 = vmatprep.subr.mxu0 %v644
        %652 = vmatpush1.msra.mxu0 %v643
        %653 = vmatprep.subr.mxu0 0.0
        %654 = vmatpush1.msra.mxu0 0.0
        %655 = vmatprep.subr.mxu0 0.0
        %656 = vmatpush1.msra.mxu0 0.0
        %657 = vmatprep.subr.mxu0 0.0
        %658 = vmatpush1.msra.mxu0 0.0
        %659 = vmatprep.subr.mxu0 0.0
        %660 = vmatpush1.msra.mxu0 0.0
        %661 = vmatprep.subr.mxu0 0.0
        %662 = vmatpush1.msra.mxu0 0.0
        %663 = vmatprep.subr.mxu0 0.0
        %664 = vmatpush1.msra.mxu0 0.0
        %665 = vmatprep.subr.mxu0 0.0
        %666 = vmatpush1.msra.mxu0 0.0
        %667 = vmatprep.subr.mxu0 0.0
        %668 = vmatpush1.msra.mxu0 0.0
        %669 = vmatprep.subr.mxu0 0.0
        %670 = vmatpush1.msra.mxu0 0.0
        %671 = vmatprep.subr.mxu0 0.0
        %672 = vmatpush1.msra.mxu0 0.0
        %673 = vmatprep.subr.mxu0 0.0
        %674 = vmatpush1.msra.mxu0 0.0
        %675 = vmatprep.subr.mxu0 0.0
        %676 = vmatpush1.msra.mxu0 0.0
        %677 = vmatprep.subr.mxu0 0.0
        %678 = vmatpush1.msra.mxu0 0.0
        %679 = vmatprep.subr.mxu0 0.0
        %680 = vmatpush1.msra.mxu0 0.0
        %681 = vmatprep.subr.mxu0 0.0
        %682 = vmatpush1.msra.mxu0 0.0
        %683 = vmatprep.subr.mxu0 0.0
        %684 = vmatpush1.msra.mxu0 0.0
        %685 = vmatprep.subr.mxu0 0.0
        %686 = vmatpush1.msra.mxu0 0.0
        %687 = vmatprep.subr.mxu0 0.0
        %688 = vmatpush1.msra.mxu0 0.0
        %689 = vmatprep.subr.mxu0 0.0
        %690 = vmatpush1.msra.mxu0 0.0
        %691 = vmatprep.subr.mxu0 0.0
        %692 = vmatpush1.msra.mxu0 0.0
        %693 = vmatprep.subr.mxu0 0.0
        %694 = vmatpush1.msra.mxu0 0.0
        %695 = vmatprep.subr.mxu0 0.0
        %696 = vmatpush1.msra.mxu0 0.0
        %697 = vmatprep.subr.mxu0 0.0
        %698 = vmatpush1.msra.mxu0 0.0
        %699 = vmatprep.subr.mxu0 0.0
        %700 = vmatpush1.msra.mxu0 0.0
        %701 = vmatprep.subr.mxu0 0.0
        %702 = vmatpush1.msra.mxu0 0.0
        %703 = vmatprep.subr.mxu0 0.0
        %704 = vmatpush1.msra.mxu0 0.0
        %705 = vmatprep.subr.mxu0 0.0
        %706 = vmatpush1.msra.mxu0 0.0
        %707 = vmatprep.subr.mxu0 0.0
        %708 = vmatpush1.msra.mxu0 0.0
        %709 = vmatprep.subr.mxu0 0.0
        %710 = vmatpush1.msra.mxu0 0.0
        %711 = vmatprep.subr.mxu0 0.0
        %712 = vmatpush1.msra.mxu0 0.0
        %713 = vmatprep.subr.mxu0 0.0
        %714 = vmatpush1.msra.mxu0 0.0
        %715 = vmatprep.mubr.f32.mxu0 0.0
        %716 = vmatmul.mubr.f32.gmra.mrb[0].mxu0 %v646
        %v717 = vpop.f32.mrb[0].mxu0
        %v718 = vadd.f32 0.0, %v717
        %v719 = vpop.f32.mrb[0].mxu0
        %v720 = vadd.f32 0.0, %v719
        %721 = vmatprep.mubr.f32.mxu0 0.0
        %722 = vmatmul.mubr.f32.gmra.mrb[0].mxu0 %v649
        %v723 = vpop.f32.mrb[0].mxu0
        %v724 = vadd.f32 0.0, %v723
        %v725 = vpop.f32.mrb[0].mxu0
        %v726 = vadd.f32 0.0, %v725
        %727 = vdwg.mxu0
        %v728 = vmul.f32 %v718, %v310
        %v729 = vmul.f32 %v720, %v311
        %v730 = vmul.f32 %v724, %v312
        %v731 = vmul.f32 %v726, %v313
        %v732 = vld [vmem:[%s7] sm:$0xff]
        %v733 = vld [vmem:[%s7 + $0x8] sm:$0xff]
        %v734 = vld [vmem:[%s7 + $0x10] sm:$0xff]
        %v735 = vld [vmem:[%s7 + $0x18] sm:$0xff]
        %v736 = vld [vmem:[%s7 + $0x20] sm:$0xff]
        %v737 = vld [vmem:[%s7 + $0x28] sm:$0xff]
        %v738 = vld [vmem:[%s7 + $0x30] sm:$0xff]
        %v739 = vld [vmem:[%s7 + $0x38] sm:$0xff]
        %v740 = vld [vmem:[%s7 + $0x40] sm:$0xff]
        %v741 = vld [vmem:[%s7 + $0x48] sm:$0xff]
        %v742 = vld [vmem:[%s7 + $0x50] sm:$0xff]
        %v743 = vld [vmem:[%s7 + $0x58] sm:$0xff]
        %v744 = vld [vmem:[%s7 + $0x60] sm:$0xff]
        %v745 = vld [vmem:[%s7 + $0x68] sm:$0xff]
        %v746 = vld [vmem:[%s7 + $0x70] sm:$0xff]
        %v747 = vld [vmem:[%s7 + $0x78] sm:$0xff]
        %v748 = vld [vmem:[%s7 + $0x80] sm:$0xff]
        %v749 = vld [vmem:[%s7 + $0x88] sm:$0xff]
        %v750 = vld [vmem:[%s7 + $0x90] sm:$0xff]
        %v751 = vld [vmem:[%s7 + $0x98] sm:$0xff]
        %v752 = vld [vmem:[%s7 + $0xa0] sm:$0xff]
        %v753 = vld [vmem:[%s7 + $0xa8] sm:$0xff]
        %v754 = vld [vmem:[%s7 + $0xb0] sm:$0xff]
        %v755 = vld [vmem:[%s7 + $0xb8] sm:$0xff]
        %v756 = vld [vmem:[%s7 + $0xc0] sm:$0xff]
        %v757 = vld [vmem:[%s7 + $0xc8] sm:$0xff]
        %v758 = vld [vmem:[%s7 + $0xd0] sm:$0xff]
        %v759 = vld [vmem:[%s7 + $0xd8] sm:$0xff]
        %v760 = vld [vmem:[%s7 + $0xe0] sm:$0xff]
        %v761 = vld [vmem:[%s7 + $0xe8] sm:$0xff]
        %v762 = vld [vmem:[%s7 + $0xf0] sm:$0xff]
        %v763 = vld [vmem:[%s7 + $0xf8] sm:$0xff]
        %764 = vmatprep.subr.mxu0 0.0
        %765 = vmatpush1.msra.mxu0 %v732
        %766 = vmatprep.subr.mxu0 0.0
        %767 = vmatpush1.msra.mxu0 %v733
        %768 = vmatprep.subr.mxu0 0.0
        %769 = vmatpush1.msra.mxu0 %v734
        %770 = vmatprep.subr.mxu0 0.0
        %771 = vmatpush1.msra.mxu0 %v735
        %772 = vmatprep.subr.mxu0 0.0
        %773 = vmatpush1.msra.mxu0 %v736
        %774 = vmatprep.subr.mxu0 0.0
        %775 = vmatpush1.msra.mxu0 %v737
        %776 = vmatprep.subr.mxu0 0.0
        %777 = vmatpush1.msra.mxu0 %v738
        %778 = vmatprep.subr.mxu0 0.0
        %779 = vmatpush1.msra.mxu0 %v739
        %780 = vmatprep.subr.mxu0 0.0
        %781 = vmatpush1.msra.mxu0 %v740
        %782 = vmatprep.subr.mxu0 0.0
        %783 = vmatpush1.msra.mxu0 %v741
        %784 = vmatprep.subr.mxu0 0.0
        %785 = vmatpush1.msra.mxu0 %v742
        %786 = vmatprep.subr.mxu0 0.0
        %787 = vmatpush1.msra.mxu0 %v743
        %788 = vmatprep.subr.mxu0 0.0
        %789 = vmatpush1.msra.mxu0 %v744
        %790 = vmatprep.subr.mxu0 0.0
        %791 = vmatpush1.msra.mxu0 %v745
        %792 = vmatprep.subr.mxu0 0.0
        %793 = vmatpush1.msra.mxu0 %v746
        %794 = vmatprep.subr.mxu0 0.0
        %795 = vmatpush1.msra.mxu0 %v747
        %796 = vmatprep.subr.mxu0 0.0
        %797 = vmatpush1.msra.mxu0 %v748
        %798 = vmatprep.subr.mxu0 0.0
        %799 = vmatpush1.msra.mxu0 %v749
        %800 = vmatprep.subr.mxu0 0.0
        %801 = vmatpush1.msra.mxu0 %v750
        %802 = vmatprep.subr.mxu0 0.0
        %803 = vmatpush1.msra.mxu0 %v751
        %804 = vmatprep.subr.mxu0 0.0
        %805 = vmatpush1.msra.mxu0 %v752
        %806 = vmatprep.subr.mxu0 0.0
        %807 = vmatpush1.msra.mxu0 %v753
        %808 = vmatprep.subr.mxu0 0.0
        %809 = vmatpush1.msra.mxu0 %v754
        %810 = vmatprep.subr.mxu0 0.0
        %811 = vmatpush1.msra.mxu0 %v755
        %812 = vmatprep.subr.mxu0 0.0
        %813 = vmatpush1.msra.mxu0 %v756
        %814 = vmatprep.subr.mxu0 0.0
        %815 = vmatpush1.msra.mxu0 %v757
        %816 = vmatprep.subr.mxu0 0.0
        %817 = vmatpush1.msra.mxu0 %v758
        %818 = vmatprep.subr.mxu0 0.0
        %819 = vmatpush1.msra.mxu0 %v759
        %820 = vmatprep.subr.mxu0 0.0
        %821 = vmatpush1.msra.mxu0 %v760
        %822 = vmatprep.subr.mxu0 0.0
        %823 = vmatpush1.msra.mxu0 %v761
        %824 = vmatprep.subr.mxu0 0.0
        %825 = vmatpush1.msra.mxu0 %v762
        %826 = vmatprep.subr.mxu0 0.0
        %827 = vmatpush1.msra.mxu0 %v763
        %828 = vmatprep.mubr.f32.mxu0 %v729
        %829 = vmatmul.mubr.f32.gmra.mrb[0].mxu0 %v728
        %v830 = vpop.f32.mrb[0].mxu0
        %v831 = vadd.f32 0.0, %v830
        %v832 = vpop.f32.mrb[0].mxu0
        %833 = vmatprep.mubr.f32.mxu0 %v731
        %834 = vmatmul.mubr.f32.gmra.mrb[0].mxu0 %v730
        %v835 = vpop.f32.mrb[0].mxu0
        %v836 = vadd.f32 0.0, %v835
        %v837 = vpop.f32.mrb[0].mxu0
        %838 = vdwg.mxu0
        %vm839 = vcmask 261120
        %840 = vst.msk [vmem:[%s301] sm:$0xff] %vm839, %v831
        %841 = vst.msk [vmem:[%s301 + $0x8] sm:$0xff] %vm839, %v836
        %s842 = sand.u32 %s203, 1
        %s843 = scalar_lea.sflag [#allocation3], %s842
        %s844 = sand.u32 %s203, 1
        %s845 = smul.addr %s844, 16
        %s846 = scalar_lea.vmem [#allocation2], %s845
        // Predicated region
        $region53: #{tpu_custom_call.1} parent=51 // pred_check
          %p847 = pneg %p213
        $region54: #{tpu_custom_call.1} parent=51 // pred_check_branch
          %849 = sbr.rel (%p847) target = $region56
        $region55: #{tpu_custom_call.1} parent=51 // pred_region
          %s850 = smul.u32 2, %s22
          %s852 = ssub.s32 256, 256
          %853 = vsyncadd %s843, %s852
          %s854 = smul.addr %s850, 128
          %s855 = scalar_lea.hbm %s8, %s854
          %s856 = sshll.u32 %s846, 4
          %s857 = int_to_ptr.vmem [resolvable:$true] %s856
          %862 = dma.vmem_to_hbm [thread:$0]  %s857, 256, %s855, %s843, 128, 128, 8
        $region56: #{tpu_custom_call.1} parent=51 // pred_fallthru
          _
      $region52: #{tpu_custom_call.1} parent=5 // pred_fallthru
        _
      %p863 = scmp.le.s32.totalorder 2, %s17
      // Predicated region
      $region57: #{tpu_custom_call.1} parent=5 // pred_check
        %p864 = pneg %p863
      $region58: #{tpu_custom_call.1} parent=5 // pred_check_branch
        %866 = sbr.rel (%p864) target = $region60
      $region59: #{tpu_custom_call.1} parent=5 // pred_region
        %s867 = ssub.s32 %s17, 2
        // Predicated region
        $region61: #{tpu_custom_call.1} parent=59 // pred_check
          %p868 = pneg %p219
        $region62: #{tpu_custom_call.1} parent=59 // pred_check_branch
          %870 = sbr.rel (%p868) target = $region64
        $region63: #{tpu_custom_call.1} parent=59 // pred_region
          %s871 = sand.u32 %s204, 1
          %s872 = scalar_lea.sflag [#allocation3], %s871
          %s873 = sand.u32 %s204, 1
          %s874 = smul.addr %s873, 16
          %s875 = scalar_lea.vmem [#allocation2], %s874
          %876 = dma.done %s872, 256
        $region64: #{tpu_custom_call.1} parent=59 // pred_fallthru
          _
      $region60: #{tpu_custom_call.1} parent=5 // pred_fallthru
        _
    $region6: #{tpu_custom_call.1} parent=1 // loop_footer
      %s21 = sadd.s32 1, %s17
    $region7: #{tpu_custom_call.1} parent=1 // loop_footer_branch
      %16 = sbr.rel target = $region3
    $region8: #{tpu_custom_call.1} parent=1 // loop_exit
      _
    %877 = vsyncpa [#allocation3], 1
    %s878 = scalar_lea.sflag [#allocation3], 1
    %879 = vsyncpa %s878, 1

</llo_original>
